<compile_context>
chip_gen: v6e
topology: v6e:2x2x1
jax: 0.10.0
libtpu: 0.0.40
codegen_flags: <defaults>
</compile_context>

<pallas_src>
import functools

import numpy as np
import jax
import jax.numpy as jnp
from jax.experimental import pallas as pl
from jax.experimental.pallas import tpu as pltpu


def _round_up(x, m):
    return ((x + m - 1) // m) * m


# ---------------------------------------------------------------------------
# Parameter construction (mirrors init_kernels in the PyTorch module).
# ---------------------------------------------------------------------------
def make_stft_kernel(win_len, fft_len, win_type="hamming"):
    if win_type is None or win_type == "None":
        window = np.ones(win_len, dtype=np.float64)
    else:
        # scipy.signal.get_window('hamming', win_len, fftbins=True)  (periodic)
        n = np.arange(win_len, dtype=np.float64)
        window = 0.54 - 0.46 * np.cos(2.0 * np.pi * n / win_len)
    N = fft_len
    fourier_basis = np.fft.rfft(np.eye(N))[:win_len]            # (win_len, N//2+1)
    real_kernel = np.real(fourier_basis)
    imag_kernel = np.imag(fourier_basis)
    kernel = np.concatenate([real_kernel, imag_kernel], 1).T    # (2*(N//2+1), win_len)
    kernel = kernel * window                                    # window on time axis
    return kernel.astype(np.float32)                            # (out_ch, win_len)


def prepare_conv_stft_weight(weight, win_len, stride, fft_len):
    """Pack the (2*dim[, 1], win_len) conv weight into a (2*dim_pad, Kp) matmul
    weight, Kp = r * stride_sub, matching the in-kernel frame-slab layout:
        w[c, j*stride_sub + s] = W[c, j*stride + s]   (zero where out of range)
    dim is padded to a multiple of 8 (sublane axis), stride to a multiple of 8.
    Done once on the host; result is a device constant.
    """
    weight = np.asarray(weight, dtype=np.float32)
    if weight.ndim == 3:                        # torch conv layout (out_ch, 1, k)
        weight = weight[:, 0, :]
    dim = fft_len // 2 + 1
    dim_pad = _round_up(dim, 8)
    r = -(-win_len // stride)
    ssub = _round_up(stride, 8)
    Kp = r * ssub
    w_full = np.zeros((2 * dim_pad, Kp), dtype=np.float32)
    for j in range(r):
        k0 = j * stride
        cols = min(stride, win_len - k0)
        if cols <= 0:
            continue
        w_full[:dim, j * ssub:j * ssub + cols] = weight[:dim, k0:k0 + cols]
        w_full[dim_pad:dim_pad + dim, j * ssub:j * ssub + cols] = \
            weight[dim:2 * dim, k0:k0 + cols]
    return jnp.asarray(w_full)                  # (2*dim_pad, r*stride_sub)


# ---------------------------------------------------------------------------
# In-kernel math helpers.
# ---------------------------------------------------------------------------
def _atan2_approx(y, x):
    """atan2(y, x) from add/mul/select + EUP reciprocal (guaranteed to lower).

    arctan on [0, 1] uses the Abramowitz & Stegun 4.4.49 polynomial
    (|err| <= ~2e-5 rad); octant fix-up via min/max + selects.
    The divide runs on the EUP (pl.reciprocal, approx) with one Newton step so
    accuracy stays in the f32 class.  atan2(0, 0) == 0, matching torch, and no
    NaNs are produced in padded lanes.
    """
    ax = jnp.abs(x)
    ay = jnp.abs(y)
    mx = jnp.maximum(ax, ay)
    mn = jnp.minimum(ax, ay)
    mxs = jnp.maximum(mx, jnp.float32(1e-30))
    rcp = pl.reciprocal(mxs, approx=True)                       # EUP slot
    rcp = rcp * (jnp.float32(2.0) - mxs * rcp)                  # one NR step
    z = mn * rcp                                                # in [0, 1]
    s = z * z
    p = ((((jnp.float32(0.0208351) * s - jnp.float32(0.0851330)) * s
           + jnp.float32(0.1801410)) * s - jnp.float32(0.3302995)) * s
         + jnp.float32(0.9998660)) * z
    p = jnp.where(ay > ax, jnp.float32(np.pi / 2) - p, p)
    p = jnp.where(x < 0, jnp.float32(np.pi) - p, p)
    return jnp.where(y < 0, -p, p)


# ---------------------------------------------------------------------------
# Pallas kernel: one (batch, frame-tile) grid step.
# ---------------------------------------------------------------------------
def _stft_kernel(sig_ref, w_ref, mags_ref, phase_ref, *, tf, r, dim_pad):
    """sig_ref   : (1, 1, stride_sub, tf + r - 1)  lane-dense signal window
       w_ref     : (2*dim_pad, r*stride_sub)       packed [real | imag] weight
       mags_ref  : (1, dim_pad, tf)
       phase_ref : (1, dim_pad, tf)
    """
    # Frame slab (K, tf): r statically lane-shifted slices stacked on sublanes.
    if r == 1:
        slab = sig_ref[0, 0, :, :tf]
    else:
        slab = jnp.concatenate(
            [sig_ref[0, 0, :, j:j + tf] for j in range(r)], axis=0)

    # One full-depth MXU contraction: (2*dim_pad, K) x (K, tf) -> (2*dim_pad, tf)
    acc = jax.lax.dot_general(
        w_ref[...], slab,
        dimension_numbers=(((1,), (0,)), ((), ())),
        preferred_element_type=jnp.float32)

    real = acc[:dim_pad, :]                     # sublane slices (8-aligned)
    imag = acc[dim_pad:, :]
    mags_ref[0] = jnp.sqrt(real * real + imag * imag)
    # TODO(synk): switch to jnp.arctan2 once its Mosaic lowering is guaranteed.
    phase_ref[0] = _atan2_approx(imag, real)


# ---------------------------------------------------------------------------
# Wrapper (padding, per-tile window packing, pallas_call, de-padding).
# ---------------------------------------------------------------------------
@functools.partial(jax.jit,
                   static_argnames=("win_len", "stride", "fft_len", "tile_frames"))
def conv_stft(x, w_packed, *, win_len, stride, fft_len, tile_frames=512):
    """ConvSTFT forward (feature_type='real'): returns (mags, phase), (B, dim, F).

    tile_frames: frames per grid step (rounded to 128).  512 fits comfortably
    on all generations; 1024 is a good choice on v5e/v6e (128 MiB VMEM).
    """
    if x.ndim == 3:                      # accept (B, 1, T) like the torch module
        x = x[:, 0, :]
    x = x.astype(jnp.float32)
    B, T = x.shape

    dim = fft_len // 2 + 1
    dim_pad = _round_up(dim, 8)          # sublane padding only -> 8 is enough
    r = -(-win_len // stride)            # each frame spans r stride-groups
    ssub = _round_up(stride, 8)
    Kp = r * ssub
    assert w_packed.shape == (2 * dim_pad, Kp), "weight not packed for this config"

    pad = win_len - stride
    Tp = T + 2 * pad
    F = (Tp - win_len) // stride + 1     # == torch conv1d output length

    # Frame-tile size: multiple of 128 (lane-dense stores).  When B == 1, halve
    # it (if possible) so the (B, nF) "parallel" grid feeds both v7x cores.
    F128 = _round_up(F, 128)
    tf = max(128, min(_round_up(tile_frames, 128), F128))
    if B == 1 and F128 >= 256:
        tf = min(tf, _round_up(F128 // 2, 128))
    nF = -(-F // tf)
    F_pad = nF * tf
    halo = r - 1                          # extra stride-columns per tile
    tfp = tf + halo

    # Signal -> stride-groups: rows[b, m, s] = x_padded[b, m*stride + s].
    S_need = F_pad + tf                   # enough groups for main + halo reshape
    need = S_need * stride
    xp = jnp.pad(x, ((0, 0), (pad, pad)))
    if Tp >= need:
        xs = xp[:, :need]                 # surplus lies beyond the last frame
    else:
        xs = jnp.pad(xp, ((0, 0), (0, need - Tp)))
    rows = xs.reshape(B, S_need, stride)
    if ssub != stride:                    # zero-pad stride -> multiple of 8
        rows = jnp.pad(rows, ((0, 0), (0, 0), (0, ssub - stride)))

    # Per-tile windows with an (r-1)-column halo; stride on sublanes, frames
    # on lanes.  Block size is O(ssub * tf), independent of T.
    main = rows[:, :F_pad, :].reshape(B, nF, tf, ssub)
    if halo > 0:
        nxt = rows[:, tf:tf + F_pad, :].reshape(B, nF, tf, ssub)
        windows = jnp.concatenate([main, nxt[:, :, :halo, :]], axis=2)
    else:
        windows = main
    sig4 = jnp.transpose(windows, (0, 1, 3, 2))          # (B, nF, ssub, tfp)

    kernel = functools.partial(_stft_kernel, tf=tf, r=r, dim_pad=dim_pad)
    out_shape = (jax.ShapeDtypeStruct((B, dim_pad, F_pad), jnp.float32),
                 jax.ShapeDtypeStruct((B, dim_pad, F_pad), jnp.float32))
    out_specs = (pl.BlockSpec((1, dim_pad, tf), lambda b, f: (b, 0, f)),
                 pl.BlockSpec((1, dim_pad, tf), lambda b, f: (b, 0, f)))

    mags, phase = pl.pallas_call(
        kernel,
        out_shape=out_shape,
        grid=(B, nF),
        in_specs=[
            pl.BlockSpec((1, 1, ssub, tfp), lambda b, f: (b, f, 0, 0)),
            # Constant block index -> the packed weight is DMA'd once and reused.
            pl.BlockSpec((2 * dim_pad, Kp), lambda b, f: (0, 0)),
        ],
        out_specs=out_specs,
        compiler_params=pltpu.CompilerParams(
            dimension_semantics=("parallel", "parallel"),
            vmem_limit_bytes=48 * 1024 * 1024),
    )(sig4, w_packed)

    # Drop sublane/frame padding; already in the PyTorch conv1d (B, dim, F) layout.
    return mags[:, :dim, :F], phase[:, :dim, :F]


# ---------------------------------------------------------------------------
# Demo / self-check
# ---------------------------------------------------------------------------
if __name__ == "__main__":
    WIN_LEN = 16
    WIN_INC = 8
    FFT_LEN = 16
    B, T = 2, 128

    weight = make_stft_kernel(WIN_LEN, FFT_LEN, "hamming")       # (fft+2, win_len)
    w_packed = prepare_conv_stft_weight(weight, WIN_LEN, WIN_INC, FFT_LEN)

    key = jax.random.PRNGKey(0)
    x = jax.random.normal(key, (B, T), dtype=jnp.float32)

    mags, phase = conv_stft(x, w_packed, win_len=WIN_LEN, stride=WIN_INC,
                            fft_len=FFT_LEN)
    mags = jax.block_until_ready(mags)
    phase = jax.block_until_ready(phase)

    # Reference: plain-JAX strided conv1d, exactly like the torch module.
    pad = WIN_LEN - WIN_INC
    xp = jnp.pad(x, ((0, 0), (pad, pad)))[:, None, :]            # (B, 1, Tp)
    w = jnp.asarray(weight)[:, None, :]                          # (out_ch, 1, win_len)
    ref = jax.lax.conv_general_dilated(
        xp, w, window_strides=(WIN_INC,), padding="VALID",
        dimension_numbers=("NCH", "OIH", "NCH"))                 # (B, out_ch, F)
    dim = FFT_LEN // 2 + 1
    ref_real, ref_imag = ref[:, :dim, :], ref[:, dim:, :]
    ref_mags = jnp.sqrt(ref_real ** 2 + ref_imag ** 2)

    F = (T + 2 * pad - WIN_LEN) // WIN_INC + 1
    assert mags.shape == (B, dim, F), mags.shape
    assert phase.shape == (B, dim, F), phase.shape

    np.testing.assert_allclose(np.asarray(mags), np.asarray(ref_mags),
                               rtol=1e-4, atol=1e-4)
    # Phase checked via re/im reconstruction (robust near zero-magnitude bins).
    np.testing.assert_allclose(np.asarray(mags * jnp.cos(phase)),
                               np.asarray(ref_real), rtol=1e-3, atol=2e-3)
    np.testing.assert_allclose(np.asarray(mags * jnp.sin(phase)),
                               np.asarray(ref_imag), rtol=1e-3, atol=2e-3)
    print("KERNEL_OK")
</pallas_src>

<mosaic_0001>
module attributes {stable_mosaic.version = 11 : i64} {
  func.func @_stft_kernel(%arg0: i32, %arg1: i32, %arg2: memref<1x1x8x129xf32, #tpu.memory_space<vmem>>, %arg3: memref<32x16xf32, #tpu.memory_space<vmem>>, %arg4: memref<1x16x128xf32, #tpu.memory_space<vmem>>, %arg5: memref<1x16x128xf32, #tpu.memory_space<vmem>>) attributes {dimension_semantics = [#tpu.dimension_semantics<parallel>, #tpu.dimension_semantics<parallel>], iteration_bounds = array<i64: 2, 1>, scalar_prefetch = 0 : i64, scratch_operands = 0 : i64, tpu.core_type = #tpu.core_type<tc>, window_params = [{transform_indices = @transform_0, window_bounds = array<i64: 1, 1, 8, 129>}, {pipeline_mode = #tpu.pipeline_mode<synchronous>, transform_indices = @transform_1, window_bounds = array<i64: 32, 16>}, {transform_indices = @transform_2, window_bounds = array<i64: 1, 16, 128>}, {transform_indices = @transform_3, window_bounds = array<i64: 1, 16, 128>}]} {
    %c0 = arith.constant 0 : index
    %c0_0 = arith.constant 0 : index
    %c0_1 = arith.constant 0 : index
    %c0_2 = arith.constant 0 : index
    %0 = vector.load %arg2[%c0, %c0_0, %c0_1, %c0_2] : memref<1x1x8x129xf32, #tpu.memory_space<vmem>>, vector<1x1x8x128xf32>
    %1 = vector.shape_cast %0 : vector<1x1x8x128xf32> to vector<8x128xf32>
    %c0_3 = arith.constant 0 : index
    %c0_4 = arith.constant 0 : index
    %c0_5 = arith.constant 0 : index
    %c1 = arith.constant 1 : index
    %2 = vector.load %arg2[%c0_3, %c0_4, %c0_5, %c1] : memref<1x1x8x129xf32, #tpu.memory_space<vmem>>, vector<1x1x8x128xf32>
    %3 = vector.shape_cast %2 : vector<1x1x8x128xf32> to vector<8x128xf32>
    %4 = tpu.concatenate %1, %3 in 0 : vector<8x128xf32>, vector<8x128xf32> -> vector<16x128xf32>
    %c0_6 = arith.constant 0 : index
    %c0_7 = arith.constant 0 : index
    %5 = vector.load %arg3[%c0_6, %c0_7] : memref<32x16xf32, #tpu.memory_space<vmem>>, vector<32x16xf32>
    %cst = arith.constant dense<0.000000e+00> : vector<32x128xf32>
    %6 = tpu.matmul %5, %4, %cst {dimension_numbers = #tpu.dot_dimension_numbers<[1], [0], [0], [1], [0, 0, 1, 1], [], []>} : vector<32x16xf32>, vector<16x128xf32>, vector<32x128xf32> -> vector<32x128xf32>
    %7 = vector.extract_strided_slice %6 {offsets = [0, 0], sizes = [16, 128], strides = [1, 1]} : vector<32x128xf32> to vector<16x128xf32>
    %8 = vector.extract_strided_slice %6 {offsets = [16, 0], sizes = [16, 128], strides = [1, 1]} : vector<32x128xf32> to vector<16x128xf32>
    %9 = arith.mulf %7, %7 : vector<16x128xf32>
    %10 = arith.mulf %8, %8 : vector<16x128xf32>
    %11 = arith.addf %9, %10 : vector<16x128xf32>
    %12 = math.sqrt %11 : vector<16x128xf32>
    %c0_8 = arith.constant 0 : index
    %c0_9 = arith.constant 0 : index
    %c0_10 = arith.constant 0 : index
    %13 = vector.load %arg4[%c0_8, %c0_9, %c0_10] : memref<1x16x128xf32, #tpu.memory_space<vmem>>, vector<1x16x128xf32>
    %14 = vector.shape_cast %13 : vector<1x16x128xf32> to vector<16x128xf32>
    %15 = vector.shape_cast %12 : vector<16x128xf32> to vector<1x16x128xf32>
    tpu.vector_store %arg4[%c0_8, %c0_9, %c0_10], %15 {strides = array<i32>} : memref<1x16x128xf32, #tpu.memory_space<vmem>>, vector<1x16x128xf32>,
    %16 = math.absf %7 : vector<16x128xf32>
    %17 = math.absf %8 : vector<16x128xf32>
    %18 = arith.maximumf %16, %17 : vector<16x128xf32>
    %19 = arith.minimumf %16, %17 : vector<16x128xf32>
    %cst_11 = arith.constant 1.000000e-30 : f32
    %20 = vector.broadcast %cst_11 : f32 to vector<16x128xf32>
    %21 = arith.maximumf %18, %20 : vector<16x128xf32>
    %22 = tpu.reciprocal %21 {approx = true} : vector<16x128xf32> -> vector<16x128xf32>
    %23 = arith.mulf %21, %22 : vector<16x128xf32>
    %cst_12 = arith.constant 2.000000e+00 : f32
    %24 = vector.broadcast %cst_12 : f32 to vector<16x128xf32>
    %25 = arith.subf %24, %23 : vector<16x128xf32>
    %26 = arith.mulf %22, %25 : vector<16x128xf32>
    %27 = arith.mulf %19, %26 : vector<16x128xf32>
    %28 = arith.mulf %27, %27 : vector<16x128xf32>
    %cst_13 = arith.constant 2.083510e-02 : f32
    %29 = vector.broadcast %cst_13 : f32 to vector<16x128xf32>
    %30 = arith.mulf %29, %28 : vector<16x128xf32>
    %cst_14 = arith.constant 8.513300e-02 : f32
    %31 = vector.broadcast %cst_14 : f32 to vector<16x128xf32>
    %32 = arith.subf %30, %31 : vector<16x128xf32>
    %33 = arith.mulf %32, %28 : vector<16x128xf32>
    %cst_15 = arith.constant 1.801410e-01 : f32
    %34 = vector.broadcast %cst_15 : f32 to vector<16x128xf32>
    %35 = arith.addf %33, %34 : vector<16x128xf32>
    %36 = arith.mulf %35, %28 : vector<16x128xf32>
    %cst_16 = arith.constant 0.330299497 : f32
    %37 = vector.broadcast %cst_16 : f32 to vector<16x128xf32>
    %38 = arith.subf %36, %37 : vector<16x128xf32>
    %39 = arith.mulf %38, %28 : vector<16x128xf32>
    %cst_17 = arith.constant 9.998660e-01 : f32
    %40 = vector.broadcast %cst_17 : f32 to vector<16x128xf32>
    %41 = arith.addf %39, %40 : vector<16x128xf32>
    %42 = arith.mulf %41, %27 : vector<16x128xf32>
    %43 = arith.cmpf ogt, %17, %16 : vector<16x128xf32>
    %cst_18 = arith.constant 1.57079637 : f32
    %44 = vector.broadcast %cst_18 : f32 to vector<16x128xf32>
    %45 = arith.subf %44, %42 : vector<16x128xf32>
    %46 = arith.select %43, %45, %42 : vector<16x128xi1>, vector<16x128xf32>
    %cst_19 = arith.constant 0.000000e+00 : f32
    %47 = vector.broadcast %cst_19 : f32 to vector<16x128xf32>
    %48 = arith.cmpf olt, %7, %47 : vector<16x128xf32>
    %cst_20 = arith.constant 3.14159274 : f32
    %49 = vector.broadcast %cst_20 : f32 to vector<16x128xf32>
    %50 = arith.subf %49, %46 : vector<16x128xf32>
    %51 = arith.select %48, %50, %46 : vector<16x128xi1>, vector<16x128xf32>
    %cst_21 = arith.constant 0.000000e+00 : f32
    %52 = vector.broadcast %cst_21 : f32 to vector<16x128xf32>
    %53 = arith.cmpf olt, %8, %52 : vector<16x128xf32>
    %cst_22 = arith.constant 0.000000e+00 : f32
    %54 = vector.broadcast %cst_22 : f32 to vector<16x128xf32>
    %55 = arith.subf %54, %51 : vector<16x128xf32>
    %56 = arith.select %53, %55, %51 : vector<16x128xi1>, vector<16x128xf32>
    %c0_23 = arith.constant 0 : index
    %c0_24 = arith.constant 0 : index
    %c0_25 = arith.constant 0 : index
    %57 = vector.load %arg5[%c0_23, %c0_24, %c0_25] : memref<1x16x128xf32, #tpu.memory_space<vmem>>, vector<1x16x128xf32>
    %58 = vector.shape_cast %57 : vector<1x16x128xf32> to vector<16x128xf32>
    %59 = vector.shape_cast %56 : vector<16x128xf32> to vector<1x16x128xf32>
    tpu.vector_store %arg5[%c0_23, %c0_24, %c0_25], %59 {strides = array<i32>} : memref<1x16x128xf32, #tpu.memory_space<vmem>>, vector<1x16x128xf32>,
    return
  }
  func.func @transform_0(%arg0: i32, %arg1: i32) -> (i32, i32, i32, i32) {
    %c0_i32 = arith.constant 0 : i32
    %c0_i32_0 = arith.constant 0 : i32
    %c0_i32_1 = arith.constant 0 : i32
    return %arg0, %arg1, %c0_i32, %c0_i32_0 : i32, i32, i32, i32
  }
  func.func @transform_1(%arg0: i32, %arg1: i32) -> (i32, i32) {
    %c0_i32 = arith.constant 0 : i32
    %c0_i32_0 = arith.constant 0 : i32
    %c0_i32_1 = arith.constant 0 : i32
    return %c0_i32, %c0_i32_0 : i32, i32
  }
  func.func @transform_2(%arg0: i32, %arg1: i32) -> (i32, i32, i32) {
    %c0_i32 = arith.constant 0 : i32
    %c0_i32_0 = arith.constant 0 : i32
    return %arg0, %c0_i32, %arg1 : i32, i32, i32
  }
  func.func @transform_3(%arg0: i32, %arg1: i32) -> (i32, i32, i32) {
    %c0_i32 = arith.constant 0 : i32
    %c0_i32_0 = arith.constant 0 : i32
    return %arg0, %c0_i32, %arg1 : i32, i32, i32
  }
}

</mosaic_0001>

<llo_original>
// kernel: conv_stft.1
$region0: #{conv_stft.1}
  #allocation0 [shape = 'u32[]', space=smem, size = 0x4, offset = 0x4, fixed_abs, tag = 'smem constant byte address 0x4 - core index']
  #allocation1 [shape = 'u32[144,128]{1,0:T(1,128)}', space=vmem, size = 0x12000, scoped, tag = 'internal scratch']
  %s0 = inlined_call_operand.vmem [shape: f32[2,1,8,129], index: 0, kind: input, shape index: {}]
  %s1 = inlined_call_operand.vmem [shape: f32[32,16], index: 1, kind: input, shape index: {}]
  %s2 = inlined_call_operand.vmem [shape: f32[2,16,128], index: 2, kind: output, shape index: {0}]
  %s3 = inlined_call_operand.vmem [shape: f32[2,16,128], index: 3, kind: output, shape index: {1}]
  %4 = xla_tuple %s2, %s3
  %s5 = sld [smem:[#allocation0]]
  $region49: #{conv_stft.1} parent=0
    _
  %s7 = ssub.s32 1, %s5
  %s8 = scalar_select 0, %s7, %s5
  loop: start=0, step=1, limit=4
  $region2: #{conv_stft.1} parent=0 // loop_pre_header
    _
  $region3: #{conv_stft.1} parent=0 // loop_header
    %s10 = sphi 0, %s14
    %p11 = scmp.ge.s32.totalorder %s10, 4
    %s17 = sphi 0, %s29
    %s18 = sphi 0, %s25
    %s19 = sphi 0, %s17
    %s20 = sphi 0, %s18
    %s21 = sphi 0, %s19
    %s22 = sphi 0, %s20
    %s34 = sphi 0, %s36
    %s37 = sphi 0, %s34
    %s38 = sphi 0, %s37
    %s54 = sphi 0, %s38
    %s58 = sphi 0, %s58
    %s60 = sphi 0, %s58
    %s61 = sphi 0, %s60
    %s75 = sphi 0, %s61
    %s83 = sphi 0, %s85
    %s86 = sphi 0, %s83
    %s87 = sphi 0, %s86
    %s103 = sphi 0, %s87
    %s111 = sphi 0, %s113
    %s114 = sphi 0, %s111
    %s115 = sphi 0, %s114
    %s131 = sphi 0, %s115
  $region4: #{conv_stft.1} parent=0 // loop_header_branch
    %13 = sbr.rel (%p11) target = $region8
  $region5: #{conv_stft.1} parent=0 // loop_body
    %s15 = ssub.s32 %s10, 1
    %s16 = ssub.s32 %s10, 2
    %s23 = sadd.s32 1, %s18
    %p24 = scmp.ge.s32.totalorder %s23, 1
    %s25 = scalar_select %p24, 0, %s23
    %s26 = sadd.s32 1, %s17
    %s27 = scalar_select %p24, %s26, %s17
    %p28 = scmp.ge.s32.totalorder %s27, 2
    %s29 = scalar_select %p28, 0, %s27
    %s30 = ssub.s32 %s17, %s29
    %s31 = ssub.s32 %s18, %s25
    %s32 = sor.u32 %s30, %s31
    %p33 = scmp.eq.s32.totalorder %s32, 0
    %s35 = sadd.s32 %s34, 1
    %s36 = scalar_select %p33, %s34, %s35
    %p39 = pneg %p33
    %p40 = scmp.eq.s32.totalorder %s10, 1
    %p41 = por %p39, %p40
    %p42 = scmp.ne.s32.totalorder %s34, %s37
    %p43 = scmp.eq.s32.totalorder %s10, 0
    %p44 = por %p42, %p43
    %p45 = scmp.ne.s32.totalorder %s34, %s37
    %p46 = scmp.eq.s32.totalorder %s15, 1
    %p47 = por %p45, %p46
    %p48 = scmp.ne.s32.totalorder %s37, %s38
    %p49 = scmp.eq.s32.totalorder %s15, 0
    %p50 = por %p48, %p49
    %p51 = scmp.ne.s32.totalorder %s37, %s38
    %p52 = scmp.eq.s32.totalorder %s16, 1
    %p53 = por %p51, %p52
    %p55 = scmp.ne.s32.totalorder %s38, %s54
    %p56 = scmp.eq.s32.totalorder %s16, 0
    %p57 = por %p55, %p56
    %s59 = sadd.s32 %s58, 1
    %p62 = scmp.eq.s32.totalorder %s10, 1
    %p63 = scmp.ne.s32.totalorder %s58, %s60
    %p64 = scmp.eq.s32.totalorder %s10, 0
    %p65 = por %p63, %p64
    %p66 = scmp.ne.s32.totalorder %s58, %s60
    %p67 = scmp.eq.s32.totalorder %s15, 1
    %p68 = por %p66, %p67
    %p69 = scmp.ne.s32.totalorder %s60, %s61
    %p70 = scmp.eq.s32.totalorder %s15, 0
    %p71 = por %p69, %p70
    %p72 = scmp.ne.s32.totalorder %s60, %s61
    %p73 = scmp.eq.s32.totalorder %s16, 1
    %p74 = por %p72, %p73
    %p76 = scmp.ne.s32.totalorder %s61, %s75
    %p77 = scmp.eq.s32.totalorder %s16, 0
    %p78 = por %p76, %p77
    %s79 = ssub.s32 %s17, %s29
    %s80 = ssub.s32 %s18, %s25
    %s81 = sor.u32 %s79, %s80
    %p82 = scmp.eq.s32.totalorder %s81, 0
    %s84 = sadd.s32 %s83, 1
    %s85 = scalar_select %p82, %s83, %s84
    %p88 = pneg %p82
    %p89 = scmp.eq.s32.totalorder %s10, 1
    %p90 = por %p88, %p89
    %p91 = scmp.ne.s32.totalorder %s83, %s86
    %p92 = scmp.eq.s32.totalorder %s10, 0
    %p93 = por %p91, %p92
    %p94 = scmp.ne.s32.totalorder %s83, %s86
    %p95 = scmp.eq.s32.totalorder %s15, 1
    %p96 = por %p94, %p95
    %p97 = scmp.ne.s32.totalorder %s86, %s87
    %p98 = scmp.eq.s32.totalorder %s15, 0
    %p99 = por %p97, %p98
    %p100 = scmp.ne.s32.totalorder %s86, %s87
    %p101 = scmp.eq.s32.totalorder %s16, 1
    %p102 = por %p100, %p101
    %p104 = scmp.ne.s32.totalorder %s87, %s103
    %p105 = scmp.eq.s32.totalorder %s16, 0
    %p106 = por %p104, %p105
    %s107 = ssub.s32 %s17, %s29
    %s108 = ssub.s32 %s18, %s25
    %s109 = sor.u32 %s107, %s108
    %p110 = scmp.eq.s32.totalorder %s109, 0
    %s112 = sadd.s32 %s111, 1
    %s113 = scalar_select %p110, %s111, %s112
    %p116 = pneg %p110
    %p117 = scmp.eq.s32.totalorder %s10, 1
    %p118 = por %p116, %p117
    %p119 = scmp.ne.s32.totalorder %s111, %s114
    %p120 = scmp.eq.s32.totalorder %s10, 0
    %p121 = por %p119, %p120
    %p122 = scmp.ne.s32.totalorder %s111, %s114
    %p123 = scmp.eq.s32.totalorder %s15, 1
    %p124 = por %p122, %p123
    %p125 = scmp.ne.s32.totalorder %s114, %s115
    %p126 = scmp.eq.s32.totalorder %s15, 0
    %p127 = por %p125, %p126
    %p128 = scmp.ne.s32.totalorder %s114, %s115
    %p129 = scmp.eq.s32.totalorder %s16, 1
    %p130 = por %p128, %p129
    %p132 = scmp.ne.s32.totalorder %s115, %s131
    %p133 = scmp.eq.s32.totalorder %s16, 0
    %p134 = por %p132, %p133
    %p135 = scmp.le.s32.totalorder 1, %s10
    %p136 = scmp.lt.s32.totalorder %s10, 3
    %p137 = pnand %p135, %p136
    %p138 = pneg %p137
    // Predicated region
    $region9: #{conv_stft.1} parent=5 // pred_check
      _
    $region10: #{conv_stft.1} parent=5 // pred_check_branch
      %140 = sbr.rel (%p137) target = $region12
    $region11: #{conv_stft.1} parent=5 // pred_region
      %s141 = ssub.s32 %s10, 1
      // Predicated region
      $region13: #{conv_stft.1} parent=11 // pred_check
        %p142 = pneg %p71
      $region14: #{conv_stft.1} parent=11 // pred_check_branch
        %144 = sbr.rel (%p142) target = $region16
      $region15: #{conv_stft.1} parent=11 // pred_region
        _
      $region16: #{conv_stft.1} parent=11 // pred_fallthru
        _
    $region12: #{conv_stft.1} parent=5 // pred_fallthru
      _
    %p145 = scmp.lt.s32.totalorder %s10, 2
    // Predicated region
    $region17: #{conv_stft.1} parent=5 // pred_check
      %p146 = pneg %p145
    $region18: #{conv_stft.1} parent=5 // pred_check_branch
      %148 = sbr.rel (%p146) target = $region20
    $region19: #{conv_stft.1} parent=5 // pred_region
      // Predicated region
      $region21: #{conv_stft.1} parent=19 // pred_check
        %p149 = pneg %p44
      $region22: #{conv_stft.1} parent=19 // pred_check_branch
        %151 = sbr.rel (%p149) target = $region24
      $region23: #{conv_stft.1} parent=19 // pred_region
        %p152 = scmp.lt.s32.totalorder %s17, 1
        %s153 = scalar_select %p152, %s17, 1
        %p154 = scmp.lt.s32.totalorder %s18, 0
        %s155 = scalar_select %p154, %s18, 0
        %s156 = smul.addr %s155, 2
        %s157 = smul.addr %s153, 2
        %s158 = sadd.s32 %s156, %s157
        %s159 = smul.addr %s158, 8
        %s160 = scalar_lea.vmem %s0, %s159
      $region24: #{conv_stft.1} parent=19 // pred_fallthru
        _
    $region20: #{conv_stft.1} parent=5 // pred_fallthru
      _
    %p161 = scmp.le.s32.totalorder 1, %s10
    %p162 = scmp.lt.s32.totalorder %s10, 3
    %p163 = pnand %p161, %p162
    %p164 = pneg %p163
    // Predicated region
    $region25: #{conv_stft.1} parent=5 // pred_check
      _
    $region26: #{conv_stft.1} parent=5 // pred_check_branch
      %166 = sbr.rel (%p163) target = $region28
    $region27: #{conv_stft.1} parent=5 // pred_region
      %s167 = ssub.s32 %s10, 1
      %p168 = scmp.lt.s32.totalorder %s19, 1
      %s169 = scalar_select %p168, %s19, 1
      %p170 = scmp.lt.s32.totalorder %s20, 0
      %s171 = scalar_select %p170, %s20, 0
      %s172 = smul.addr %s171, 2
      %s173 = smul.addr %s169, 2
      %s174 = sadd.s32 %s172, %s173
      %s175 = smul.addr %s174, 8
      %s176 = scalar_lea.vmem %s0, %s175
      %p177 = pneg %p50
      %p178 = pneg %p47
      %p179 = pneg %p71
      %p180 = pneg %p68
      %p181 = pneg %p99
      %p182 = pneg %p96
      %p183 = scmp.lt.s32.totalorder %s19, 1
      %s184 = scalar_select %p183, %s19, 1
      %p185 = scmp.lt.s32.totalorder %s20, 0
      %s186 = scalar_select %p185, %s20, 0
      %s187 = smul.addr %s184, 2
      %s188 = sadd.s32 %s186, %s187
      %s189 = smul.addr %s188, 8
      %s190 = scalar_lea.vmem %s2, %s189
      %p191 = pneg %p127
      %p192 = pneg %p124
      %p193 = scmp.lt.s32.totalorder %s19, 1
      %s194 = scalar_select %p193, %s19, 1
      %p195 = scmp.lt.s32.totalorder %s20, 0
      %s196 = scalar_select %p195, %s20, 0
      %s197 = smul.addr %s194, 2
      %s198 = sadd.s32 %s196, %s197
      %s199 = smul.addr %s198, 8
      %s200 = scalar_lea.vmem %s3, %s199
      %p201 = scmp.lt.s32.totalorder %s19, 1
      %s202 = scalar_select %p201, %s19, 1
      %p203 = scmp.lt.s32.totalorder %s20, 0
      %s204 = scalar_select %p203, %s20, 0
      %s205 = smul.addr %s204, 2
      %s206 = smul.addr %s202, 2
      %s207 = sadd.s32 %s205, %s206
      %s208 = smul.addr %s207, 8
      %s209 = scalar_lea.vmem %s0, %s208
      %p210 = scmp.lt.s32.totalorder %s19, 1
      %s211 = scalar_select %p210, %s19, 1
      %p212 = scmp.lt.s32.totalorder %s20, 0
      %s213 = scalar_select %p212, %s20, 0
      %s214 = smul.addr %s211, 2
      %s215 = sadd.s32 %s213, %s214
      %s216 = smul.addr %s215, 8
      %s217 = scalar_lea.vmem %s2, %s216
      %p218 = scmp.lt.s32.totalorder %s19, 1
      %s219 = scalar_select %p218, %s19, 1
      %p220 = scmp.lt.s32.totalorder %s20, 0
      %s221 = scalar_select %p220, %s20, 0
      %s222 = smul.addr %s219, 2
      %s223 = sadd.s32 %s221, %s222
      %s224 = smul.addr %s223, 8
      %s225 = scalar_lea.vmem %s3, %s224
      %v226 = vld [vmem:[%s209] sm:$0xff]
      %v227 = vld [vmem:[%s209 + $0x8] sm:$0xff]
      %230 = vrot.lane.b32.xlu0 %v226, 127
      %v231 = vpop.permute.xlu0 %230
      %232 = vrot.lane.b32.xlu0 %v227, 127
      %v233 = vpop.permute.xlu0 %232
      %vm234 = vcmask 1039360
      %v235 = vsel %vm234, %v231, %v233
      %v237 = vld [vmem:[%s1] sm:$0xff]
      %v238 = vld [vmem:[%s1 + $0x8] sm:$0xff]
      %v239 = vld [vmem:[%s1 + $0x10] sm:$0xff]
      %v240 = vld [vmem:[%s1 + $0x18] sm:$0xff]
      %vm241 = vcmask 130048
      %v243 = vsel %vm241, %v237, 0
      %v246 = vsel %vm241, %v238, 0
      %v249 = vsel %vm241, %v239, 0
      %v252 = vsel %vm241, %v240, 0
      %254 = vmatprep.subr.mxu0 0.0
      %255 = vmatpush1.msra.mxu0 0.0
      %256 = vmatprep.subr.mxu0 0.0
      %257 = vmatpush1.msra.mxu0 0.0
      %258 = vmatprep.subr.mxu0 0.0
      %259 = vmatpush1.msra.mxu0 0.0
      %260 = vmatprep.subr.mxu0 0.0
      %261 = vmatpush1.msra.mxu0 0.0
      %262 = vmatprep.subr.mxu0 0.0
      %263 = vmatpush1.msra.mxu0 0.0
      %264 = vmatprep.subr.mxu0 0.0
      %265 = vmatpush1.msra.mxu0 0.0
      %266 = vmatprep.subr.mxu0 0.0
      %267 = vmatpush1.msra.mxu0 0.0
      %268 = vmatprep.subr.mxu0 0.0
      %269 = vmatpush1.msra.mxu0 0.0
      %270 = vmatprep.subr.mxu0 0.0
      %271 = vmatpush1.msra.mxu0 0.0
      %272 = vmatprep.subr.mxu0 0.0
      %273 = vmatpush1.msra.mxu0 0.0
      %274 = vmatprep.subr.mxu0 0.0
      %275 = vmatpush1.msra.mxu0 0.0
      %276 = vmatprep.subr.mxu0 0.0
      %277 = vmatpush1.msra.mxu0 0.0
      %278 = vmatprep.subr.mxu0 0.0
      %279 = vmatpush1.msra.mxu0 0.0
      %280 = vmatprep.subr.mxu0 0.0
      %281 = vmatpush1.msra.mxu0 0.0
      %282 = vmatprep.subr.mxu0 0.0
      %283 = vmatpush1.msra.mxu0 %v235
      %284 = vmatprep.subr.mxu0 0.0
      %285 = vmatpush1.msra.mxu0 %v226
      %286 = vmatprep.subr.mxu0 0.0
      %287 = vmatpush2.msra.mxu0 0.0
      %288 = vmatprep.subr.mxu0 0.0
      %289 = vmatpush2.msra.mxu0 0.0
      %290 = vmatprep.subr.mxu0 0.0
      %291 = vmatpush2.msra.mxu0 0.0
      %292 = vmatprep.subr.mxu0 0.0
      %293 = vmatpush2.msra.mxu0 0.0
      %294 = vmatprep.subr.mxu0 0.0
      %295 = vmatpush2.msra.mxu0 0.0
      %296 = vmatprep.subr.mxu0 0.0
      %297 = vmatpush2.msra.mxu0 0.0
      %298 = vmatprep.subr.mxu0 0.0
      %299 = vmatpush2.msra.mxu0 0.0
      %300 = vmatprep.subr.mxu0 0.0
      %301 = vmatpush2.msra.mxu0 0.0
      %302 = vmatprep.subr.mxu0 0.0
      %303 = vmatpush2.msra.mxu0 0.0
      %304 = vmatprep.subr.mxu0 0.0
      %305 = vmatpush2.msra.mxu0 0.0
      %306 = vmatprep.subr.mxu0 0.0
      %307 = vmatpush2.msra.mxu0 0.0
      %308 = vmatprep.subr.mxu0 0.0
      %309 = vmatpush2.msra.mxu0 0.0
      %310 = vmatprep.subr.mxu0 0.0
      %311 = vmatpush2.msra.mxu0 0.0
      %312 = vmatprep.subr.mxu0 0.0
      %313 = vmatpush2.msra.mxu0 0.0
      %314 = vmatprep.subr.mxu0 0.0
      %315 = vmatpush2.msra.mxu0 0.0
      %316 = vmatprep.subr.mxu0 0.0
      %317 = vmatpush2.msra.mxu0 0.0
      %318 = vmatprep.mubr.f32.mxu0 0.0
      %319 = vmatmul.mubr.f32.gmra.mxu0 %v243
      %v320 = vpop.f32.mrf.mxu0
      %v321 = vadd.f32 0.0, %v320
      %v322 = vpop.f32.mrf.mxu0
      %323 = vmatprep.mubr.f32.mxu0 0.0
      %324 = vmatmul.mubr.f32.gmra.mxu0 %v246
      %v325 = vpop.f32.mrf.mxu0
      %v326 = vadd.f32 0.0, %v325
      %v327 = vpop.f32.mrf.mxu0
      %328 = vmatprep.mubr.f32.mxu0 0.0
      %329 = vmatmul.mubr.f32.gmra.mxu0 %v249
      %v330 = vpop.f32.mrf.mxu0
      %v331 = vadd.f32 0.0, %v330
      %v332 = vpop.f32.mrf.mxu0
      %333 = vmatprep.mubr.f32.mxu0 0.0
      %334 = vmatmul.mubr.f32.gmra.mxu0 %v252
      %v335 = vpop.f32.mrf.mxu0
      %v336 = vadd.f32 0.0, %v335
      %v337 = vpop.f32.mrf.mxu0
      %338 = vdwg.mxu0
      %v339 = vmul.f32 %v321, %v321
      %v340 = vmul.f32 %v326, %v326
      %v341 = vmul.f32 %v331, %v331
      %v342 = vmul.f32 %v336, %v336
      %v343 = vadd.f32 %v339, %v341
      %v344 = vadd.f32 %v340, %v342
      %v345 = vrsqrt.pop %v343
      %v346 = vmul.f32 %v343, %v345
      %vm347 = vcmp.eq.f32.partialorder %v343, inf
      %v348 = vsel %vm347, %v343, %v346
      %vm349 = vcmp.eq.f32.partialorder %v343, 0.0
      %v350 = vand.u32 %v343, 2147483648
      %v351 = vsel %vm349, %v350, %v348
      %v352 = vrsqrt.pop %v344
      %v353 = vmul.f32 %v344, %v352
      %vm354 = vcmp.eq.f32.partialorder %v344, inf
      %v355 = vsel %vm354, %v344, %v353
      %vm356 = vcmp.eq.f32.partialorder %v344, 0.0
      %v357 = vand.u32 %v344, 2147483648
      %v358 = vsel %vm356, %v357, %v355
      %359 = vst [vmem:[%s217] sm:$0xff] %v351
      %360 = vst [vmem:[%s217 + $0x8] sm:$0xff] %v358
      %v361 = vand.u32 2147483647, %v321
      %v362 = vand.u32 2147483647, %v326
      %v363 = vand.u32 2147483647, %v331
      %v364 = vand.u32 2147483647, %v336
      %v365 = vmax.f32 %v361, %v363
      %v366 = vmax.f32 %v362, %v364
      %v367 = vmin.f32 %v361, %v363
      %v368 = vmin.f32 %v362, %v364
      %v369 = vmax.f32 %v365, 1e-30
      %v370 = vmax.f32 %v366, 1e-30
      %v371 = vrcp.pop %v369
      %v372 = vrcp.pop %v370
      %v373 = vmul.f32 %v369, %v371
      %v374 = vmul.f32 %v370, %v372
      %v375 = vsub.f32 2.0, %v373
      %v376 = vsub.f32 2.0, %v374
      %v377 = vmul.f32 %v371, %v375
      %v378 = vmul.f32 %v372, %v376
      %v379 = vmul.f32 %v367, %v377
      %v380 = vmul.f32 %v368, %v378
      %v381 = vmul.f32 %v379, %v379
      %v382 = vmul.f32 %v380, %v380
      %v383 = vmul.f32 %v381, 0.0208351
      %v384 = vmul.f32 %v382, 0.0208351
      %v385 = vsub.f32 %v383, 0.085133
      %v386 = vsub.f32 %v384, 0.085133
      %v387 = vmul.f32 %v385, %v381
      %v388 = vmul.f32 %v386, %v382
      %v389 = vadd.f32 %v387, 0.180141
      %v390 = vadd.f32 %v388, 0.180141
      %v391 = vmul.f32 %v389, %v381
      %v392 = vmul.f32 %v390, %v382
      %v393 = vsub.f32 %v391, 0.3302995
      %v394 = vsub.f32 %v392, 0.3302995
      %v395 = vmul.f32 %v393, %v381
      %v396 = vmul.f32 %v394, %v382
      %v397 = vadd.f32 %v395, 0.999866
      %v398 = vadd.f32 %v396, 0.999866
      %v399 = vmul.f32 %v397, %v379
      %v400 = vmul.f32 %v398, %v380
      %vm401 = vcmp.gt.f32.partialorder %v363, %v361
      %vm402 = vcmp.gt.f32.partialorder %v364, %v362
      %v403 = vsub.f32 1.5707964, %v399
      %v404 = vsub.f32 1.5707964, %v400
      %v405 = vsel %vm401, %v403, %v399
      %v406 = vsel %vm402, %v404, %v400
      %vm407 = vcmp.lt.f32.partialorder %v321, 0.0
      %vm408 = vcmp.lt.f32.partialorder %v326, 0.0
      %v409 = vsub.f32 3.1415927, %v405
      %v410 = vsub.f32 3.1415927, %v406
      %v411 = vsel %vm407, %v409, %v405
      %v412 = vsel %vm408, %v410, %v406
      %vm413 = vcmp.lt.f32.partialorder %v331, 0.0
      %vm414 = vcmp.lt.f32.partialorder %v336, 0.0
      %v415 = vsub.f32 0.0, %v411
      %v416 = vsub.f32 0.0, %v412
      %v417 = vsel %vm413, %v415, %v411
      %v418 = vsel %vm414, %v416, %v412
      %419 = vst [vmem:[%s225] sm:$0xff] %v417
      %420 = vst [vmem:[%s225 + $0x8] sm:$0xff] %v418
      %p421 = scmp.lt.s32.totalorder %s19, 1
      %s422 = scalar_select %p421, %s19, 1
      %p423 = scmp.lt.s32.totalorder %s20, 0
      %s424 = scalar_select %p423, %s20, 0
      %s425 = smul.addr %s422, 2
      %s426 = sadd.s32 %s424, %s425
      %s427 = smul.addr %s426, 8
      %s428 = scalar_lea.vmem %s2, %s427
      %p429 = scmp.lt.s32.totalorder %s19, 1
      %s430 = scalar_select %p429, %s19, 1
      %p431 = scmp.lt.s32.totalorder %s20, 0
      %s432 = scalar_select %p431, %s20, 0
      %s433 = smul.addr %s430, 2
      %s434 = sadd.s32 %s432, %s433
      %s435 = smul.addr %s434, 8
      %s436 = scalar_lea.vmem %s3, %s435
      // Predicated region
      $region29: #{conv_stft.1} parent=27 // pred_check
        %p437 = pneg %p96
      $region30: #{conv_stft.1} parent=27 // pred_check_branch
        %439 = sbr.rel (%p437) target = $region32
      $region31: #{conv_stft.1} parent=27 // pred_region
        _
      $region32: #{conv_stft.1} parent=27 // pred_fallthru
        _
      // Predicated region
      $region33: #{conv_stft.1} parent=27 // pred_check
        %p440 = pneg %p124
      $region34: #{conv_stft.1} parent=27 // pred_check_branch
        %442 = sbr.rel (%p440) target = $region36
      $region35: #{conv_stft.1} parent=27 // pred_region
        _
      $region36: #{conv_stft.1} parent=27 // pred_fallthru
        _
    $region28: #{conv_stft.1} parent=5 // pred_fallthru
      _
    %p443 = scmp.le.s32.totalorder 2, %s10
    // Predicated region
    $region37: #{conv_stft.1} parent=5 // pred_check
      %p444 = pneg %p443
    $region38: #{conv_stft.1} parent=5 // pred_check_branch
      %446 = sbr.rel (%p444) target = $region40
    $region39: #{conv_stft.1} parent=5 // pred_region
      %s447 = ssub.s32 %s10, 2
      // Predicated region
      $region41: #{conv_stft.1} parent=39 // pred_check
        %p448 = pneg %p102
      $region42: #{conv_stft.1} parent=39 // pred_check_branch
        %450 = sbr.rel (%p448) target = $region44
      $region43: #{conv_stft.1} parent=39 // pred_region
        %p451 = scmp.lt.s32.totalorder %s21, 1
        %s452 = scalar_select %p451, %s21, 1
        %p453 = scmp.lt.s32.totalorder %s22, 0
        %s454 = scalar_select %p453, %s22, 0
        %s455 = smul.addr %s452, 2
        %s456 = sadd.s32 %s454, %s455
        %s457 = smul.addr %s456, 8
        %s458 = scalar_lea.vmem %s2, %s457
      $region44: #{conv_stft.1} parent=39 // pred_fallthru
        _
      // Predicated region
      $region45: #{conv_stft.1} parent=39 // pred_check
        %p459 = pneg %p130
      $region46: #{conv_stft.1} parent=39 // pred_check_branch
        %461 = sbr.rel (%p459) target = $region48
      $region47: #{conv_stft.1} parent=39 // pred_region
        %p462 = scmp.lt.s32.totalorder %s21, 1
        %s463 = scalar_select %p462, %s21, 1
        %p464 = scmp.lt.s32.totalorder %s22, 0
        %s465 = scalar_select %p464, %s22, 0
        %s466 = smul.addr %s463, 2
        %s467 = sadd.s32 %s465, %s466
        %s468 = smul.addr %s467, 8
        %s469 = scalar_lea.vmem %s3, %s468
      $region48: #{conv_stft.1} parent=39 // pred_fallthru
        _
    $region40: #{conv_stft.1} parent=5 // pred_fallthru
      _
  $region6: #{conv_stft.1} parent=0 // loop_footer
    %s14 = sadd.s32 1, %s10
  $region7: #{conv_stft.1} parent=0 // loop_footer_branch
    %9 = sbr.rel target = $region3
  $region8: #{conv_stft.1} parent=0 // loop_exit
    _

</llo_original>
